<compile_context>
chip_gen: v7x
topology: tpu7x:2x2x1
jax: 0.10.0
libtpu: 0.0.40
codegen_flags: <defaults>
</compile_context>

<pallas_src>
import jax
import jax.numpy as jnp
from jax.experimental import pallas as pl
from jax.experimental.pallas import tpu as pltpu


def _round_up(n: int, m: int) -> int:
    return ((n + m - 1) // m) * m


def quantile_net_kernel(x_ref, w1_ref, b1_ref, w2_ref, b2_ref, out_ref):
    """Fused FCBody (linear + ReLU) + quantile-head linear for one batch tile."""
    x = x_ref[...]                                                     # [TB, S] bf16
    # Body: phi = ReLU(x @ W1 + b1); MXU matmul with f32 accumulation,
    # f32 epilogue (correct + fast on v5e which has no bf16 VPU path).
    phi = jnp.dot(x, w1_ref[...],
                  preferred_element_type=jnp.float32) + b1_ref[...]    # [TB, H] f32
    phi = jnp.maximum(phi, 0.0)
    # Quantile head: q = phi @ W2 + b2 (bf16 operands, f32 accumulate).
    q = jnp.dot(phi.astype(w2_ref.dtype), w2_ref[...],
                preferred_element_type=jnp.float32) + b2_ref[...]      # [TB, A*Q] f32
    out_ref[...] = q.astype(out_ref.dtype)                             # bf16 writeback


def quantile_net_forward(x, w1, b1, w2, b2, action_dim, num_quantiles,
                         *, block_batch=None, target_tile_rows=2048,
                         compute_dtype=jnp.bfloat16, out_dtype=jnp.bfloat16):
    batch, state_dim = x.shape
    feature_dim = w1.shape[1]
    out_dim = action_dim * num_quantiles
    assert w2.shape == (feature_dim, out_dim)
    assert b1.shape == (1, feature_dim) and b2.shape == (1, out_dim)

    # --- batch tiling: 16-row granularity; 1 tile up to target_tile_rows,
    # --- otherwise an even number of tiles (v7x megacore friendly). ----------
    padded16 = _round_up(max(batch, 1), 16)
    if block_batch is None:
        if padded16 <= target_tile_rows:
            block_batch = padded16
        else:
            num_tiles = pl.cdiv(padded16, target_tile_rows)
            if num_tiles % 2:
                num_tiles += 1
            block_batch = _round_up(pl.cdiv(padded16, num_tiles), 16)
    padded_batch = _round_up(max(batch, 1), block_batch)
    if padded_batch != batch:
        x = jnp.pad(x, ((0, padded_batch - batch), (0, 0)))

    # --- dtypes: bf16 streamed operands, f32 biases / accumulation -----------
    x = x.astype(compute_dtype)
    w1 = w1.astype(compute_dtype)
    w2 = w2.astype(compute_dtype)
    b1 = b1.astype(jnp.float32)
    b2 = b2.astype(jnp.float32)

    grid = (padded_batch // block_batch,)

    # Full-array blocks are legal even when dims aren't multiples of (8,128),
    # so the 32-wide output head needs no lane padding.
    in_specs = [
        pl.BlockSpec((block_batch, state_dim), lambda i: (i, 0)),   # x: streamed
        pl.BlockSpec((state_dim, feature_dim), lambda i: (0, 0)),   # W1: resident
        pl.BlockSpec((1, feature_dim), lambda i: (0, 0)),           # b1: resident
        pl.BlockSpec((feature_dim, out_dim), lambda i: (0, 0)),     # W2: resident
        pl.BlockSpec((1, out_dim), lambda i: (0, 0)),               # b2: resident
    ]
    out_specs = pl.BlockSpec((block_batch, out_dim), lambda i: (i, 0))

    itemsize = jnp.dtype(compute_dtype).itemsize
    out_itemsize = jnp.dtype(out_dtype).itemsize
    flops = 2 * padded_batch * (state_dim * feature_dim + feature_dim * out_dim)
    bytes_accessed = (padded_batch * state_dim * itemsize          # x in
                      + padded_batch * out_dim * out_itemsize      # out
                      + state_dim * feature_dim * itemsize         # W1
                      + feature_dim * out_dim * itemsize           # W2
                      + (feature_dim + out_dim) * 4)               # biases
    cost = pl.CostEstimate(flops=flops, transcendentals=0,
                           bytes_accessed=bytes_accessed)

    # VMEM budget (honest): double-buffered x/out tiles + (default
    # double-buffered) resident weights & biases, 2x headroom, capped at
    # 32 MiB so it is safe on v7x's tighter scoped VMEM as well.
    tile_bytes = (2 * block_batch * state_dim * itemsize
                  + 2 * block_batch * out_dim * out_itemsize
                  + 2 * (state_dim * feature_dim + feature_dim * out_dim) * itemsize
                  + 2 * (feature_dim + out_dim) * 4)
    vmem_limit = int(min(max(2 * tile_bytes, 4 * 1024 * 1024), 32 * 1024 * 1024))

    quantiles_pad = pl.pallas_call(
        quantile_net_kernel,
        out_shape=jax.ShapeDtypeStruct((padded_batch, out_dim), out_dtype),
        grid=grid,
        in_specs=in_specs,
        out_specs=out_specs,
        compiler_params=pltpu.CompilerParams(
            dimension_semantics=("parallel",),
            vmem_limit_bytes=vmem_limit),
        cost_estimate=cost,
    )(x, w1, b1, w2, b2)

    # Glue: drop batch padding, then view((-1, action_dim, num_quantiles)).
    return quantiles_pad[:batch].reshape(batch, action_dim, num_quantiles)


def init_params(key, state_dim, feature_dim, action_dim, num_quantiles):
    # Deterministic synthetic init (stand-in for layer_init's orthogonal init).
    k1, k2, k3, k4 = jax.random.split(key, 4)
    out_dim = action_dim * num_quantiles
    w1 = jax.random.normal(k1, (state_dim, feature_dim), jnp.float32) / jnp.sqrt(state_dim)
    b1 = 0.1 * jax.random.normal(k3, (1, feature_dim), jnp.float32)
    w2 = jax.random.normal(k2, (feature_dim, out_dim), jnp.float32) / jnp.sqrt(feature_dim)
    b2 = 0.1 * jax.random.normal(k4, (1, out_dim), jnp.float32)
    return w1, b1, w2, b2


if __name__ == "__main__":
    # Small shapes consistent with the module.
    batch = 2
    state_dim = 16          # raw observation dim fed to the body
    feature_dim = 32        # body.feature_dim
    action_dim = 4
    num_quantiles = 8

    key = jax.random.PRNGKey(0)
    kx, kp = jax.random.split(key)
    x = jax.random.normal(kx, (batch, state_dim), jnp.float32)
    w1, b1, w2, b2 = init_params(kp, state_dim, feature_dim, action_dim, num_quantiles)

    quantiles = quantile_net_forward(x, w1, b1, w2, b2, action_dim, num_quantiles)
    quantiles = jax.block_until_ready(quantiles)

    # Pure-JAX reference with the same bf16 operand quantization, f32
    # accumulation and a final bf16 cast (matching the kernel epilogue).
    q16 = lambda a: a.astype(jnp.bfloat16).astype(jnp.float32)
    phi_ref = jnp.maximum(q16(x) @ q16(w1) + b1, 0.0)
    q_ref_f32 = q16(phi_ref) @ q16(w2) + b2
    q_ref = q_ref_f32.astype(jnp.bfloat16).astype(jnp.float32).reshape(
        batch, action_dim, num_quantiles)

    assert quantiles.shape == (batch, action_dim, num_quantiles)
    got = quantiles.astype(jnp.float32)
    max_err = float(jnp.max(jnp.abs(got - q_ref)))
    assert jnp.allclose(got, q_ref, atol=3e-2, rtol=3e-2), max_err

    print("KERNEL_OK")
</pallas_src>

<mosaic_0001>
module attributes {stable_mosaic.version = 11 : i64} {
  func.func @quantile_net_kernel(%arg0: i32, %arg1: memref<16x16xbf16, #tpu.memory_space<vmem>>, %arg2: memref<16x32xbf16, #tpu.memory_space<vmem>>, %arg3: memref<1x32xf32, #tpu.memory_space<vmem>>, %arg4: memref<32x32xbf16, #tpu.memory_space<vmem>>, %arg5: memref<1x32xf32, #tpu.memory_space<vmem>>, %arg6: memref<16x32xbf16, #tpu.memory_space<vmem>>) attributes {dimension_semantics = [#tpu.dimension_semantics<parallel>], iteration_bounds = array<i64: 1>, scalar_prefetch = 0 : i64, scratch_operands = 0 : i64, tpu.core_type = #tpu.core_type<tc>, window_params = [{transform_indices = @transform_0, window_bounds = array<i64: 16, 16>}, {pipeline_mode = #tpu.pipeline_mode<synchronous>, transform_indices = @transform_1, window_bounds = array<i64: 16, 32>}, {pipeline_mode = #tpu.pipeline_mode<synchronous>, transform_indices = @transform_2, window_bounds = array<i64: 1, 32>}, {pipeline_mode = #tpu.pipeline_mode<synchronous>, transform_indices = @transform_3, window_bounds = array<i64: 32, 32>}, {pipeline_mode = #tpu.pipeline_mode<synchronous>, transform_indices = @transform_4, window_bounds = array<i64: 1, 32>}, {transform_indices = @transform_5, window_bounds = array<i64: 16, 32>}]} {
    %c0 = arith.constant 0 : index
    %c0_0 = arith.constant 0 : index
    %0 = vector.load %arg1[%c0, %c0_0] : memref<16x16xbf16, #tpu.memory_space<vmem>>, vector<16x16xbf16>
    %c0_1 = arith.constant 0 : index
    %c0_2 = arith.constant 0 : index
    %1 = vector.load %arg2[%c0_1, %c0_2] : memref<16x32xbf16, #tpu.memory_space<vmem>>, vector<16x32xbf16>
    %cst = arith.constant dense<0.000000e+00> : vector<16x32xf32>
    %2 = tpu.matmul %0, %1, %cst {dimension_numbers = #tpu.dot_dimension_numbers<[1], [0], [0], [1], [0, 0, 1, 1], [], []>} : vector<16x16xbf16>, vector<16x32xbf16>, vector<16x32xf32> -> vector<16x32xf32>
    %c0_3 = arith.constant 0 : index
    %c0_4 = arith.constant 0 : index
    %3 = vector.load %arg3[%c0_3, %c0_4] : memref<1x32xf32, #tpu.memory_space<vmem>>, vector<1x32xf32>
    %4 = vector.broadcast %3 : vector<1x32xf32> to vector<16x32xf32>
    %5 = arith.addf %2, %4 : vector<16x32xf32>
    %cst_5 = arith.constant 0.000000e+00 : f32
    %6 = vector.broadcast %cst_5 : f32 to vector<16x32xf32>
    %7 = arith.maximumf %5, %6 : vector<16x32xf32>
    %8 = arith.truncf %7 : vector<16x32xf32> to vector<16x32xbf16>
    %c0_6 = arith.constant 0 : index
    %c0_7 = arith.constant 0 : index
    %9 = vector.load %arg4[%c0_6, %c0_7] : memref<32x32xbf16, #tpu.memory_space<vmem>>, vector<32x32xbf16>
    %cst_8 = arith.constant dense<0.000000e+00> : vector<16x32xf32>
    %10 = tpu.matmul %8, %9, %cst_8 {dimension_numbers = #tpu.dot_dimension_numbers<[1], [0], [0], [1], [0, 0, 1, 1], [], []>} : vector<16x32xbf16>, vector<32x32xbf16>, vector<16x32xf32> -> vector<16x32xf32>
    %c0_9 = arith.constant 0 : index
    %c0_10 = arith.constant 0 : index
    %11 = vector.load %arg5[%c0_9, %c0_10] : memref<1x32xf32, #tpu.memory_space<vmem>>, vector<1x32xf32>
    %12 = vector.broadcast %11 : vector<1x32xf32> to vector<16x32xf32>
    %13 = arith.addf %10, %12 : vector<16x32xf32>
    %14 = arith.truncf %13 : vector<16x32xf32> to vector<16x32xbf16>
    %c0_11 = arith.constant 0 : index
    %c0_12 = arith.constant 0 : index
    %15 = vector.load %arg6[%c0_11, %c0_12] : memref<16x32xbf16, #tpu.memory_space<vmem>>, vector<16x32xbf16>
    tpu.vector_store %arg6[%c0_11, %c0_12], %14 {strides = array<i32>} : memref<16x32xbf16, #tpu.memory_space<vmem>>, vector<16x32xbf16>,
    return
  }
  func.func @transform_0(%arg0: i32) -> (i32, i32) {
    %c0_i32 = arith.constant 0 : i32
    %c0_i32_0 = arith.constant 0 : i32
    return %arg0, %c0_i32 : i32, i32
  }
  func.func @transform_1(%arg0: i32) -> (i32, i32) {
    %c0_i32 = arith.constant 0 : i32
    %c0_i32_0 = arith.constant 0 : i32
    %c0_i32_1 = arith.constant 0 : i32
    return %c0_i32, %c0_i32_0 : i32, i32
  }
  func.func @transform_2(%arg0: i32) -> (i32, i32) {
    %c0_i32 = arith.constant 0 : i32
    %c0_i32_0 = arith.constant 0 : i32
    %c0_i32_1 = arith.constant 0 : i32
    return %c0_i32, %c0_i32_0 : i32, i32
  }
  func.func @transform_3(%arg0: i32) -> (i32, i32) {
    %c0_i32 = arith.constant 0 : i32
    %c0_i32_0 = arith.constant 0 : i32
    %c0_i32_1 = arith.constant 0 : i32
    return %c0_i32, %c0_i32_0 : i32, i32
  }
  func.func @transform_4(%arg0: i32) -> (i32, i32) {
    %c0_i32 = arith.constant 0 : i32
    %c0_i32_0 = arith.constant 0 : i32
    %c0_i32_1 = arith.constant 0 : i32
    return %c0_i32, %c0_i32_0 : i32, i32
  }
  func.func @transform_5(%arg0: i32) -> (i32, i32) {
    %c0_i32 = arith.constant 0 : i32
    %c0_i32_0 = arith.constant 0 : i32
    return %arg0, %c0_i32 : i32, i32
  }
}

</mosaic_0001>

<llo_original>
// kernel: tpu_custom_call.1
$region0: #{tpu_custom_call.1}
  #allocation0 [shape = 'u32[]', space=smem, size = 0x4, offset = 0x4, fixed_abs, tag = 'smem constant byte address 0x4 - core index']
  #allocation1 [shape = 'u32[144,128]{1,0:T(1,128)}', space=vmem, size = 0x12000, scoped, tag = 'internal scratch']
  %s0 = inlined_call_operand.hbm [shape: bf16[16,16], index: 0, kind: input, shape index: {}]
  %s1 = inlined_call_operand.hbm [shape: bf16[16,32], index: 1, kind: input, shape index: {}]
  %s2 = inlined_call_operand.vmem [shape: f32[1,32], index: 2, kind: input, shape index: {}]
  %s3 = inlined_call_operand.hbm [shape: bf16[32,32], index: 3, kind: input, shape index: {}]
  %s4 = inlined_call_operand.vmem [shape: f32[1,32], index: 4, kind: input, shape index: {}]
  %s5 = inlined_call_operand.hbm [shape: bf16[16,32], index: 5, kind: output, shape index: {}]
  %s6 = sld [smem:[#allocation0]]
  $region42: #{tpu_custom_call.1} parent=0
    _
  %s8 = ssub.s32 1, %s6
  %s9 = scalar_select 0, %s8, %s6
  $region1: #{tpu_custom_call.1} parent=0
    #allocation2 [shape = 'u8[4096]{0}', space=vmem, size = 0x1000, scoped, tag = 'input window, operand 0, single buffered']
    #allocation3 [shape = 's32[1]{0}', space=sflag, size = 0x4, scoped, tag = 'scoped memory for tpu_custom_call.1']
    #allocation4 [shape = 's32[1]{0}', space=sflag, size = 0x4, scoped, tag = 'scoped memory for tpu_custom_call.1']
    #allocation5 [shape = 'u8[4096]{0}', space=vmem, size = 0x1000, scoped, tag = 'input window, operand 1, single buffered']
    #allocation6 [shape = 's32[1]{0}', space=sflag, size = 0x4, scoped, tag = 'scoped memory for tpu_custom_call.1']
    #allocation7 [shape = 'u8[8192]{0}', space=vmem, size = 0x2000, scoped, tag = 'input window, operand 3, single buffered']
    #allocation8 [shape = 'u8[4096]{0}', space=vmem, size = 0x1000, scoped, tag = 'output window, operand 0, single buffered']
    %10 = vsyncpa [#allocation3], 0
    %11 = vsyncpa [#allocation6], 0
    %12 = vsyncpa [#allocation4], 0
    // Predicated region
    $region2: #{tpu_custom_call.1} parent=1 // pred_check
      _
    $region3: #{tpu_custom_call.1} parent=1 // pred_check_branch
      %14 = sbr.rel (0) target = $region5
    $region4: #{tpu_custom_call.1} parent=1 // pred_region
      %s16 = ssub.s32 128, 128
      %17 = vsyncadd [#allocation3], %s16
      %s18 = sshll.u32 [#allocation2], 4
      %s19 = int_to_ptr.vmem [resolvable:$true] %s18
      %24 = dma.hbm_to_vmem [thread:$0]  %s0, 128, %s19, [#allocation3], 64, 64, 4
    $region5: #{tpu_custom_call.1} parent=1 // pred_fallthru
      _
    // Predicated region
    $region6: #{tpu_custom_call.1} parent=1 // pred_check
      _
    $region7: #{tpu_custom_call.1} parent=1 // pred_check_branch
      %26 = sbr.rel (0) target = $region9
    $region8: #{tpu_custom_call.1} parent=1 // pred_region
      %s28 = ssub.s32 128, 128
      %29 = vsyncadd [#allocation6], %s28
      %s30 = sshll.u32 [#allocation5], 4
      %s31 = int_to_ptr.vmem [resolvable:$true] %s30
      %36 = dma.hbm_to_vmem [thread:$0]  %s1, 128, %s31, [#allocation6], 64, 64, 4
    $region9: #{tpu_custom_call.1} parent=1 // pred_fallthru
      _
    // Predicated region
    $region10: #{tpu_custom_call.1} parent=1 // pred_check
      _
    $region11: #{tpu_custom_call.1} parent=1 // pred_check_branch
      %38 = sbr.rel (0) target = $region13
    $region12: #{tpu_custom_call.1} parent=1 // pred_region
      _
    $region13: #{tpu_custom_call.1} parent=1 // pred_fallthru
      _
    // Predicated region
    $region14: #{tpu_custom_call.1} parent=1 // pred_check
      _
    $region15: #{tpu_custom_call.1} parent=1 // pred_check_branch
      %40 = sbr.rel (0) target = $region17
    $region16: #{tpu_custom_call.1} parent=1 // pred_region
      %s42 = ssub.s32 256, 256
      %43 = vsyncadd [#allocation6], %s42
      %s44 = sshll.u32 [#allocation7], 4
      %s45 = int_to_ptr.vmem [resolvable:$true] %s44
      %50 = dma.hbm_to_vmem [thread:$0]  %s3, 256, %s45, [#allocation6], 64, 64, 4
    $region17: #{tpu_custom_call.1} parent=1 // pred_fallthru
      _
    // Predicated region
    $region18: #{tpu_custom_call.1} parent=1 // pred_check
      _
    $region19: #{tpu_custom_call.1} parent=1 // pred_check_branch
      %52 = sbr.rel (0) target = $region21
    $region20: #{tpu_custom_call.1} parent=1 // pred_region
      _
    $region21: #{tpu_custom_call.1} parent=1 // pred_fallthru
      _
    // Predicated region
    $region22: #{tpu_custom_call.1} parent=1 // pred_check
      _
    $region23: #{tpu_custom_call.1} parent=1 // pred_check_branch
      %54 = sbr.rel (0) target = $region25
    $region24: #{tpu_custom_call.1} parent=1 // pred_region
      %55 = dma.done [#allocation3], 128
    $region25: #{tpu_custom_call.1} parent=1 // pred_fallthru
      _
    // Predicated region
    $region26: #{tpu_custom_call.1} parent=1 // pred_check
      _
    $region27: #{tpu_custom_call.1} parent=1 // pred_check_branch
      %57 = sbr.rel (0) target = $region29
    $region28: #{tpu_custom_call.1} parent=1 // pred_region
      %58 = dma.done [#allocation6], 128
    $region29: #{tpu_custom_call.1} parent=1 // pred_fallthru
      _
    // Predicated region
    $region30: #{tpu_custom_call.1} parent=1 // pred_check
      _
    $region31: #{tpu_custom_call.1} parent=1 // pred_check_branch
      %60 = sbr.rel (0) target = $region33
    $region32: #{tpu_custom_call.1} parent=1 // pred_region
      %61 = dma.done [#allocation6], 256
    $region33: #{tpu_custom_call.1} parent=1 // pred_fallthru
      _
    %v63 = vld [vmem:[#allocation2] sm:$0xf]
    %v64 = vld [vmem:[#allocation2 + $0x4] sm:$0xf]
    %v65 = vld [vmem:[#allocation5] sm:$0xf]
    %v66 = vld [vmem:[#allocation5 + $0x4] sm:$0xf]
    %v67 = vld [vmem:[%s2] sm:$0x1]
    %v69 = vlaneseq
    %v70 = vshrl.u32 %v69, 7
    %v71 = vsub.s32 0, %v70
    %v72 = vrot.slane %v67, %v71
    %v76 = vunpack.c.l.b16 %v63
    %v77 = vunpack.c.l.b16 %v64
    %v78 = vpack.c.b16 %v77, %v76
    %v81 = vunpack.c.l.b16 %v65
    %v82 = vunpack.c.l.b16 %v66
    %v83 = vpack.c.b16 %v82, %v81
    %vm85 = vcmask 130048
    %v87 = vsel %vm85, %v78, 0
    %89 = vmatprep.subr.bf16.mxu0 0
    %90 = vmatpush1.bf16.msra.mxu0 %v83
    %91 = vmatprep.subr.bf16.mxu0 0
    %92 = vmatpush1.bf16.msra.mxu0 0
    %93 = vmatprep.subr.bf16.mxu0 0
    %94 = vmatpush1.bf16.msra.mxu0 0
    %95 = vmatprep.subr.bf16.mxu0 0
    %96 = vmatpush1.bf16.msra.mxu0 0
    %97 = vmatprep.subr.bf16.mxu0 0
    %98 = vmatpush1.bf16.msra.mxu0 0
    %99 = vmatprep.subr.bf16.mxu0 0
    %100 = vmatpush1.bf16.msra.mxu0 0
    %101 = vmatprep.subr.bf16.mxu0 0
    %102 = vmatpush1.bf16.msra.mxu0 0
    %103 = vmatprep.subr.bf16.mxu0 0
    %104 = vmatpush1.bf16.msra.mxu0 0
    %105 = vmatprep.subr.bf16.mxu0 0
    %106 = vmatpush1.bf16.msra.mxu0 0
    %107 = vmatprep.subr.bf16.mxu0 0
    %108 = vmatpush1.bf16.msra.mxu0 0
    %109 = vmatprep.subr.bf16.mxu0 0
    %110 = vmatpush1.bf16.msra.mxu0 0
    %111 = vmatprep.subr.bf16.mxu0 0
    %112 = vmatpush1.bf16.msra.mxu0 0
    %113 = vmatprep.subr.bf16.mxu0 0
    %114 = vmatpush1.bf16.msra.mxu0 0
    %115 = vmatprep.subr.bf16.mxu0 0
    %116 = vmatpush1.bf16.msra.mxu0 0
    %117 = vmatprep.subr.bf16.mxu0 0
    %118 = vmatpush1.bf16.msra.mxu0 0
    %119 = vmatprep.subr.bf16.mxu0 0
    %120 = vmatpush1.bf16.msra.mxu0 0
    %121 = vmatprep.mubr.bf16.mxu0 0
    %122 = vmatmul.mubr.bf16.gmra.mrb[0].mxu0 %v87
    %v123 = vpop.f32.mrb[0].mxu0
    %v124 = vadd.f32 %v72, %v123
    %v125 = vpop.f32.mrb[0].mxu0
    %v126 = vpop.f32.mrb[0].mxu0
    %v127 = vadd.f32 %v72, %v126
    %v128 = vpop.f32.mrb[0].mxu0
    %129 = vdwg.mxu0
    %v130 = vmax.f32 %v124, 0.0
    %v131 = vmax.f32 %v127, 0.0
    %v132 = vpack.c.bf16 %v131, %v130
    %v133 = vld [vmem:[#allocation7] sm:$0xf]
    %v134 = vld [vmem:[#allocation7 + $0x4] sm:$0xf]
    %v135 = vld [vmem:[#allocation7 + $0x8] sm:$0xf]
    %v136 = vld [vmem:[#allocation7 + $0xc] sm:$0xf]
    %v137 = vld [vmem:[%s4] sm:$0x1]
    %v139 = vlaneseq
    %v140 = vshrl.u32 %v139, 7
    %v141 = vsub.s32 0, %v140
    %v142 = vrot.slane %v137, %v141
    %v148 = vunpack.c.l.b16 %v133
    %v149 = vunpack.c.l.b16 %v134
    %v150 = vunpack.c.l.b16 %v135
    %v151 = vunpack.c.l.b16 %v136
    %v152 = vpack.c.b16 %v149, %v148
    %v153 = vpack.c.b16 %v151, %v150
    %vm156 = vcmask 261120
    %v158 = vsel %vm156, %v132, 0
    %160 = vmatprep.subr.bf16.mxu0 0
    %161 = vmatpush1.bf16.msra.mxu0 %v152
    %162 = vmatprep.subr.bf16.mxu0 0
    %163 = vmatpush1.bf16.msra.mxu0 %v153
    %164 = vmatprep.subr.bf16.mxu0 0
    %165 = vmatpush1.bf16.msra.mxu0 0
    %166 = vmatprep.subr.bf16.mxu0 0
    %167 = vmatpush1.bf16.msra.mxu0 0
    %168 = vmatprep.subr.bf16.mxu0 0
    %169 = vmatpush1.bf16.msra.mxu0 0
    %170 = vmatprep.subr.bf16.mxu0 0
    %171 = vmatpush1.bf16.msra.mxu0 0
    %172 = vmatprep.subr.bf16.mxu0 0
    %173 = vmatpush1.bf16.msra.mxu0 0
    %174 = vmatprep.subr.bf16.mxu0 0
    %175 = vmatpush1.bf16.msra.mxu0 0
    %176 = vmatprep.subr.bf16.mxu0 0
    %177 = vmatpush1.bf16.msra.mxu0 0
    %178 = vmatprep.subr.bf16.mxu0 0
    %179 = vmatpush1.bf16.msra.mxu0 0
    %180 = vmatprep.subr.bf16.mxu0 0
    %181 = vmatpush1.bf16.msra.mxu0 0
    %182 = vmatprep.subr.bf16.mxu0 0
    %183 = vmatpush1.bf16.msra.mxu0 0
    %184 = vmatprep.subr.bf16.mxu0 0
    %185 = vmatpush1.bf16.msra.mxu0 0
    %186 = vmatprep.subr.bf16.mxu0 0
    %187 = vmatpush1.bf16.msra.mxu0 0
    %188 = vmatprep.subr.bf16.mxu0 0
    %189 = vmatpush1.bf16.msra.mxu0 0
    %190 = vmatprep.subr.bf16.mxu0 0
    %191 = vmatpush1.bf16.msra.mxu0 0
    %192 = vmatprep.mubr.bf16.mxu0 0
    %193 = vmatmul.mubr.bf16.gmra.mrb[0].mxu0 %v158
    %v194 = vpop.f32.mrb[0].mxu0
    %v195 = vadd.f32 %v142, %v194
    %v196 = vpop.f32.mrb[0].mxu0
    %v197 = vpop.f32.mrb[0].mxu0
    %v198 = vadd.f32 %v142, %v197
    %v199 = vpop.f32.mrb[0].mxu0
    %200 = vdwg.mxu0
    %v201 = vpack.c.bf16 %v198, %v195
    %v203 = vunpack.c.l.b16 %v201
    %v204 = vunpack.c.h.b16 %v201
    %v205 = vpack.c.b16 %v203, %v203
    %v206 = vpack.c.b16 %v204, %v204
    %vm209 = vcmask 257024
    %210 = vst.msk [vmem:[#allocation8] sm:$0xf] %vm209, %v205
    %211 = vst.msk [vmem:[#allocation8 + $0x4] sm:$0xf] %vm209, %v206
    // Predicated region
    $region34: #{tpu_custom_call.1} parent=1 // pred_check
      _
    $region35: #{tpu_custom_call.1} parent=1 // pred_check_branch
      %213 = sbr.rel (0) target = $region37
    $region36: #{tpu_custom_call.1} parent=1 // pred_region
      %s215 = ssub.s32 128, 128
      %216 = vsyncadd [#allocation4], %s215
      %s217 = sshll.u32 [#allocation8], 4
      %s218 = int_to_ptr.vmem [resolvable:$true] %s217
      %223 = dma.vmem_to_hbm [thread:$0]  %s218, 128, %s5, [#allocation4], 64, 64, 4
    $region37: #{tpu_custom_call.1} parent=1 // pred_fallthru
      _
    // Predicated region
    $region38: #{tpu_custom_call.1} parent=1 // pred_check
      _
    $region39: #{tpu_custom_call.1} parent=1 // pred_check_branch
      %225 = sbr.rel (0) target = $region41
    $region40: #{tpu_custom_call.1} parent=1 // pred_region
      %226 = dma.done [#allocation4], 128
    $region41: #{tpu_custom_call.1} parent=1 // pred_fallthru
      _
    %227 = vsyncpa [#allocation3], 1
    %228 = vsyncpa [#allocation6], 1
    %229 = vsyncpa [#allocation4], 1

</llo_original>
